<compile_context>
chip_gen: v7x
topology: tpu7x:2x2x1
jax: 0.10.0
libtpu: 0.0.40
codegen_flags: <defaults>
</compile_context>

<pallas_src>
import jax
import jax.numpy as jnp
from jax.experimental import pallas as pl
from jax.experimental.pallas import tpu as pltpu


def _round_up(v, m):
    return (v + m - 1) // m * m


def _cdiv(a, b):
    return (a + b - 1) // b


def _chip_info():
    """Returns (vmem_capacity_bytes, tensorcores_per_device) with safe fallbacks."""
    kind = ""
    try:
        kind = jax.devices()[0].device_kind.lower()
    except Exception:
        pass
    # 2 TensorCores share one device on v7x and on megacore parts (v4/v5p).
    multi_tc = any(t in kind for t in ("v7", "7x", "v4", "v5p"))

    vmem = None
    try:
        vmem = int(pltpu.get_tpu_info().vmem_capacity_bytes)
    except Exception:
        vmem = None
    if vmem is None:
        # v7x has 64 MiB/TC; v5e/v6e have 128 MiB.  Unknown -> assume the
        # smaller capacity so we never overshoot physical VMEM.
        vmem = (64 << 20) if (multi_tc or not kind) else (128 << 20)
    return vmem, (2 if multi_tc else 1)


def _make_kernel(bb, l, c, n, out_dtype):
    def kernel(x_ref, mk_ref, mv_ref, o_ref):
        # x_ref: (bb, l, c); mk_ref: (c, n); mv_ref: (n, c)
        x = x_ref[...]                                   # native dtype, no upcast
        x2d = x.reshape(bb * l, c)

        # attn logits = x @ W_k^T  (MXU matmul, f32 accumulation)
        logits = jnp.dot(x2d, mk_ref[...], preferred_element_type=jnp.float32)
        logits = logits.reshape(bb, l, n)

        # softmax over the sequence axis L (PyTorch dim=1), in f32
        m = jnp.max(logits, axis=1, keepdims=True)
        e = jnp.exp(logits - m)
        denom = jnp.sum(e, axis=1, keepdims=True)
        p = e * pl.reciprocal(denom, approx=True)        # EUP reciprocal, not VPU div

        # renormalize over the token axis (PyTorch dim=2); exact reciprocal on
        # the tiny (bb, l, 1) rowsum avoids compounding approx errors.
        rowsum = jnp.sum(p, axis=2, keepdims=True)
        attn = p * (1.0 / rowsum)

        # out = attn @ W_v^T + x
        attn2d = attn.reshape(bb * l, n).astype(mv_ref.dtype)
        out = jnp.dot(attn2d, mv_ref[...], preferred_element_type=jnp.float32)
        out = out.reshape(bb, l, c) + x.astype(jnp.float32)
        o_ref[...] = out.astype(out_dtype)

    return kernel


def external_attention(x, mk, mv, *, block_b=None):
    """x: (B, L, C); mk: (C, N) == W_k^T; mv: (N, C) == W_v^T."""
    B, L, C = x.shape
    Ck, N = mk.shape
    assert Ck == C and mv.shape == (N, C)

    x_itm = jnp.dtype(x.dtype).itemsize
    w_itm = jnp.dtype(mk.dtype).itemsize

    vmem_cap, n_tc = _chip_info()
    if vmem_cap <= (64 << 20):            # v7x-class: 64 MiB per TensorCore
        vmem_target, vmem_limit = 40 << 20, 48 << 20
    else:                                 # v5e / v6e: 128 MiB
        vmem_target, vmem_limit = 96 << 20, 100 << 20

    # Per-step VMEM working set, accounted at vreg granularity:
    # double-buffered x/out slabs, double-buffered resident weights, f32 temps.
    lanes_c = _round_up(C, 128)
    lanes_n = _round_up(N, 128)

    def vmem_estimate(bb):
        rows = _round_up(bb * L, 8)
        io = 4 * rows * lanes_c * x_itm                 # 2x-buffered x in + out
        weights = 4 * lanes_c * lanes_n * w_itm         # 2x-buffered mk + mv
        temps = rows * (4 * lanes_n + 3 * lanes_c) * 4  # f32 intermediates
        return io + weights + temps + (2 << 20)

    if block_b is None:
        # ~512 M-rows per grid step keeps the MXU issue stream full and
        # amortizes the per-step pipeline overhead; shrink to the VMEM target.
        block_b = max(1, min(B, _cdiv(512, L)))
        while block_b > 1 and vmem_estimate(block_b) > vmem_target:
            block_b = _cdiv(block_b, 2)

    steps = _cdiv(B, block_b)
    if n_tc > 1 and B >= 2 and steps % 2 != 0:
        # Even step count so both TensorCores get the same number of steps.
        steps = max(2, steps + 1)
    block_b = _cdiv(B, steps)          # re-balance: batch pad is < one block
    bpad = steps * block_b

    # Guarded batch pad: skipped entirely when B is already a multiple.
    xp = x if bpad == B else jnp.pad(x, ((0, bpad - B), (0, 0), (0, 0)))

    cost = pl.CostEstimate(
        flops=4 * B * L * C * N,                        # two matmuls
        transcendentals=B * L * N,                      # exp in the softmax
        bytes_accessed=2 * B * L * C * x_itm + 2 * C * N * w_itm,
    )

    out = pl.pallas_call(
        _make_kernel(block_b, L, C, N, x.dtype),
        out_shape=jax.ShapeDtypeStruct((bpad, L, C), x.dtype),
        grid=(steps,),
        in_specs=[
            pl.BlockSpec((block_b, L, C), lambda b: (b, 0, 0)),  # x slab
            pl.BlockSpec((C, N), lambda b: (0, 0)),              # W_k^T (resident)
            pl.BlockSpec((N, C), lambda b: (0, 0)),              # W_v^T (resident)
        ],
        out_specs=pl.BlockSpec((block_b, L, C), lambda b: (b, 0, 0)),
        compiler_params=pltpu.CompilerParams(
            dimension_semantics=("parallel",),
            vmem_limit_bytes=int(vmem_limit),
        ),
        cost_estimate=cost,
    )(xp, mk, mv)

    return out if bpad == B else out[:B]


def reference(x, mk, mv):
    attn = jnp.einsum("blc,cn->bln", x, mk)
    attn = jax.nn.softmax(attn, axis=1)
    attn = attn / jnp.sum(attn, axis=2, keepdims=True)
    out = jnp.einsum("bln,nc->blc", attn, mv)
    return out + x


if __name__ == "__main__":
    B, L, C, N = 2, 8, 32, 16   # batch, seq (num boxes), channel, num_token

    key = jax.random.PRNGKey(0)
    kx, kk, kv = jax.random.split(key, 3)

    x = jax.random.normal(kx, (B, L, C), dtype=jnp.float32)
    # Deterministic "Kaiming-ish" linear weights (pre-transposed):
    mk = jax.random.normal(kk, (C, N), dtype=jnp.float32) / jnp.sqrt(C)  # W_k^T
    mv = jax.random.normal(kv, (N, C), dtype=jnp.float32) / jnp.sqrt(N)  # W_v^T

    out = jax.block_until_ready(external_attention(x, mk, mv))

    ref = reference(x, mk, mv)
    assert out.shape == (B, L, C)
    # Tolerance covers pl.reciprocal(approx=True) (~2^-14 relative) in the
    # softmax normalization.
    assert jnp.allclose(out, ref, atol=2e-3, rtol=2e-3), float(
        jnp.max(jnp.abs(out - ref)))

    print("KERNEL_OK")
</pallas_src>

<mosaic_0001>
module attributes {stable_mosaic.version = 11 : i64} {
  func.func @kernel(%arg0: i32, %arg1: memref<2x8x32xf32, #tpu.memory_space<vmem>>, %arg2: memref<32x16xf32, #tpu.memory_space<vmem>>, %arg3: memref<16x32xf32, #tpu.memory_space<vmem>>, %arg4: memref<2x8x32xf32, #tpu.memory_space<vmem>>) attributes {dimension_semantics = [#tpu.dimension_semantics<parallel>], iteration_bounds = array<i64: 1>, scalar_prefetch = 0 : i64, scratch_operands = 0 : i64, tpu.core_type = #tpu.core_type<tc>, window_params = [{transform_indices = @transform_0, window_bounds = array<i64: 2, 8, 32>}, {pipeline_mode = #tpu.pipeline_mode<synchronous>, transform_indices = @transform_1, window_bounds = array<i64: 32, 16>}, {pipeline_mode = #tpu.pipeline_mode<synchronous>, transform_indices = @transform_2, window_bounds = array<i64: 16, 32>}, {transform_indices = @transform_3, window_bounds = array<i64: 2, 8, 32>}]} {
    %c0 = arith.constant 0 : index
    %c0_0 = arith.constant 0 : index
    %c0_1 = arith.constant 0 : index
    %0 = vector.load %arg1[%c0, %c0_0, %c0_1] : memref<2x8x32xf32, #tpu.memory_space<vmem>>, vector<2x8x32xf32>
    %1 = vector.shape_cast %0 : vector<2x8x32xf32> to vector<16x32xf32>
    %c0_2 = arith.constant 0 : index
    %c0_3 = arith.constant 0 : index
    %2 = vector.load %arg2[%c0_2, %c0_3] : memref<32x16xf32, #tpu.memory_space<vmem>>, vector<32x16xf32>
    %cst = arith.constant dense<0.000000e+00> : vector<16x16xf32>
    %3 = tpu.matmul %1, %2, %cst {dimension_numbers = #tpu.dot_dimension_numbers<[1], [0], [0], [1], [0, 0, 1, 1], [], []>} : vector<16x32xf32>, vector<32x16xf32>, vector<16x16xf32> -> vector<16x16xf32>
    %4 = vector.shape_cast %3 : vector<16x16xf32> to vector<2x8x16xf32>
    %cst_4 = arith.constant dense<0xFF800000> : vector<2x16xf32>
    %5 = vector.multi_reduction <maximumf>, %4, %cst_4 [1] : vector<2x8x16xf32> to vector<2x16xf32>
    %6 = vector.shape_cast %5 : vector<2x16xf32> to vector<2x1x16xf32>
    %7 = vector.broadcast %6 : vector<2x1x16xf32> to vector<2x8x16xf32>
    %8 = arith.subf %4, %7 : vector<2x8x16xf32>
    %9 = math.exp %8 : vector<2x8x16xf32>
    %cst_5 = arith.constant dense<0.000000e+00> : vector<2x16xf32>
    %10 = vector.multi_reduction <add>, %9, %cst_5 [1] : vector<2x8x16xf32> to vector<2x16xf32>
    %11 = vector.shape_cast %10 : vector<2x16xf32> to vector<2x1x16xf32>
    %12 = tpu.reciprocal %11 {approx = true} : vector<2x1x16xf32> -> vector<2x1x16xf32>
    %13 = vector.broadcast %12 : vector<2x1x16xf32> to vector<2x8x16xf32>
    %14 = arith.mulf %9, %13 : vector<2x8x16xf32>
    %cst_6 = arith.constant dense<0.000000e+00> : vector<2x8xf32>
    %15 = vector.multi_reduction <add>, %14, %cst_6 [2] : vector<2x8x16xf32> to vector<2x8xf32>
    %16 = vector.shape_cast %15 : vector<2x8xf32> to vector<2x8x1xf32>
    %cst_7 = arith.constant 1.000000e+00 : f32
    %17 = vector.broadcast %cst_7 : f32 to vector<2x8x1xf32>
    %18 = arith.divf %17, %16 : vector<2x8x1xf32>
    %19 = vector.broadcast %18 : vector<2x8x1xf32> to vector<2x8x16xf32>
    %20 = arith.mulf %14, %19 : vector<2x8x16xf32>
    %21 = vector.shape_cast %20 : vector<2x8x16xf32> to vector<16x16xf32>
    %c0_8 = arith.constant 0 : index
    %c0_9 = arith.constant 0 : index
    %22 = vector.load %arg3[%c0_8, %c0_9] : memref<16x32xf32, #tpu.memory_space<vmem>>, vector<16x32xf32>
    %cst_10 = arith.constant dense<0.000000e+00> : vector<16x32xf32>
    %23 = tpu.matmul %21, %22, %cst_10 {dimension_numbers = #tpu.dot_dimension_numbers<[1], [0], [0], [1], [0, 0, 1, 1], [], []>} : vector<16x16xf32>, vector<16x32xf32>, vector<16x32xf32> -> vector<16x32xf32>
    %24 = vector.shape_cast %23 : vector<16x32xf32> to vector<2x8x32xf32>
    %25 = arith.addf %24, %0 : vector<2x8x32xf32>
    %c0_11 = arith.constant 0 : index
    %c0_12 = arith.constant 0 : index
    %c0_13 = arith.constant 0 : index
    %26 = vector.load %arg4[%c0_11, %c0_12, %c0_13] : memref<2x8x32xf32, #tpu.memory_space<vmem>>, vector<2x8x32xf32>
    tpu.vector_store %arg4[%c0_11, %c0_12, %c0_13], %25 {strides = array<i32>} : memref<2x8x32xf32, #tpu.memory_space<vmem>>, vector<2x8x32xf32>,
    return
  }
  func.func @transform_0(%arg0: i32) -> (i32, i32, i32) {
    %c0_i32 = arith.constant 0 : i32
    %c0_i32_0 = arith.constant 0 : i32
    %c0_i32_1 = arith.constant 0 : i32
    return %arg0, %c0_i32, %c0_i32_0 : i32, i32, i32
  }
  func.func @transform_1(%arg0: i32) -> (i32, i32) {
    %c0_i32 = arith.constant 0 : i32
    %c0_i32_0 = arith.constant 0 : i32
    %c0_i32_1 = arith.constant 0 : i32
    return %c0_i32, %c0_i32_0 : i32, i32
  }
  func.func @transform_2(%arg0: i32) -> (i32, i32) {
    %c0_i32 = arith.constant 0 : i32
    %c0_i32_0 = arith.constant 0 : i32
    %c0_i32_1 = arith.constant 0 : i32
    return %c0_i32, %c0_i32_0 : i32, i32
  }
  func.func @transform_3(%arg0: i32) -> (i32, i32, i32) {
    %c0_i32 = arith.constant 0 : i32
    %c0_i32_0 = arith.constant 0 : i32
    %c0_i32_1 = arith.constant 0 : i32
    return %arg0, %c0_i32, %c0_i32_0 : i32, i32, i32
  }
}

</mosaic_0001>

<llo_original>
// kernel: tpu_custom_call.1
$region0: #{tpu_custom_call.1}
  #allocation0 [shape = 'u32[]', space=smem, size = 0x4, offset = 0x4, fixed_abs, tag = 'smem constant byte address 0x4 - core index']
  #allocation1 [shape = 'u32[144,128]{1,0:T(1,128)}', space=vmem, size = 0x12000, scoped, tag = 'internal scratch']
  %s0 = inlined_call_operand.hbm [shape: f32[2,8,32], index: 0, kind: input, shape index: {}]
  %s1 = inlined_call_operand.hbm [shape: f32[32,16], index: 1, kind: input, shape index: {}]
  %s2 = inlined_call_operand.hbm [shape: f32[16,32], index: 2, kind: input, shape index: {}]
  %s3 = inlined_call_operand.hbm [shape: f32[2,8,32], index: 3, kind: output, shape index: {}]
  %s4 = sld [smem:[#allocation0]]
  $region34: #{tpu_custom_call.1} parent=0
    _
  %s6 = ssub.s32 1, %s4
  %s7 = scalar_select 0, %s6, %s4
  $region1: #{tpu_custom_call.1} parent=0
    #allocation2 [shape = 'u8[8192]{0}', space=vmem, size = 0x2000, scoped, tag = 'input window, operand 0, single buffered']
    #allocation3 [shape = 's32[1]{0}', space=sflag, size = 0x4, scoped, tag = 'scoped memory for tpu_custom_call.1']
    #allocation4 [shape = 's32[1]{0}', space=sflag, size = 0x4, scoped, tag = 'scoped memory for tpu_custom_call.1']
    #allocation5 [shape = 'u8[16384]{0}', space=vmem, size = 0x4000, scoped, tag = 'input window, operand 1, single buffered']
    #allocation6 [shape = 's32[1]{0}', space=sflag, size = 0x4, scoped, tag = 'scoped memory for tpu_custom_call.1']
    #allocation7 [shape = 'u8[8192]{0}', space=vmem, size = 0x2000, scoped, tag = 'input window, operand 2, single buffered']
    #allocation8 [shape = 'u8[8192]{0}', space=vmem, size = 0x2000, scoped, tag = 'output window, operand 0, single buffered']
    %8 = vsyncpa [#allocation3], 0
    %9 = vsyncpa [#allocation6], 0
    %10 = vsyncpa [#allocation4], 0
    // Predicated region
    $region2: #{tpu_custom_call.1} parent=1 // pred_check
      _
    $region3: #{tpu_custom_call.1} parent=1 // pred_check_branch
      %12 = sbr.rel (0) target = $region5
    $region4: #{tpu_custom_call.1} parent=1 // pred_region
      %s14 = ssub.s32 256, 256
      %15 = vsyncadd [#allocation3], %s14
      %s16 = sshll.u32 [#allocation2], 4
      %s17 = int_to_ptr.vmem [resolvable:$true] %s16
      %22 = dma.hbm_to_vmem [thread:$0]  %s0, 256, %s17, [#allocation3], 128, 128, 8
    $region5: #{tpu_custom_call.1} parent=1 // pred_fallthru
      _
    // Predicated region
    $region6: #{tpu_custom_call.1} parent=1 // pred_check
      _
    $region7: #{tpu_custom_call.1} parent=1 // pred_check_branch
      %24 = sbr.rel (0) target = $region9
    $region8: #{tpu_custom_call.1} parent=1 // pred_region
      %s26 = ssub.s32 512, 512
      %27 = vsyncadd [#allocation6], %s26
      %s28 = sshll.u32 [#allocation5], 4
      %s29 = int_to_ptr.vmem [resolvable:$true] %s28
      %34 = dma.hbm_to_vmem [thread:$0]  %s1, 512, %s29, [#allocation6], 128, 128, 8
    $region9: #{tpu_custom_call.1} parent=1 // pred_fallthru
      _
    // Predicated region
    $region10: #{tpu_custom_call.1} parent=1 // pred_check
      _
    $region11: #{tpu_custom_call.1} parent=1 // pred_check_branch
      %36 = sbr.rel (0) target = $region13
    $region12: #{tpu_custom_call.1} parent=1 // pred_region
      %s38 = ssub.s32 256, 256
      %39 = vsyncadd [#allocation6], %s38
      %s40 = sshll.u32 [#allocation7], 4
      %s41 = int_to_ptr.vmem [resolvable:$true] %s40
      %46 = dma.hbm_to_vmem [thread:$0]  %s2, 256, %s41, [#allocation6], 128, 128, 8
    $region13: #{tpu_custom_call.1} parent=1 // pred_fallthru
      _
    // Predicated region
    $region14: #{tpu_custom_call.1} parent=1 // pred_check
      _
    $region15: #{tpu_custom_call.1} parent=1 // pred_check_branch
      %48 = sbr.rel (0) target = $region17
    $region16: #{tpu_custom_call.1} parent=1 // pred_region
      %49 = dma.done [#allocation3], 256
    $region17: #{tpu_custom_call.1} parent=1 // pred_fallthru
      _
    // Predicated region
    $region18: #{tpu_custom_call.1} parent=1 // pred_check
      _
    $region19: #{tpu_custom_call.1} parent=1 // pred_check_branch
      %51 = sbr.rel (0) target = $region21
    $region20: #{tpu_custom_call.1} parent=1 // pred_region
      %52 = dma.done [#allocation6], 512
    $region21: #{tpu_custom_call.1} parent=1 // pred_fallthru
      _
    // Predicated region
    $region22: #{tpu_custom_call.1} parent=1 // pred_check
      _
    $region23: #{tpu_custom_call.1} parent=1 // pred_check_branch
      %54 = sbr.rel (0) target = $region25
    $region24: #{tpu_custom_call.1} parent=1 // pred_region
      %55 = dma.done [#allocation6], 256
    $region25: #{tpu_custom_call.1} parent=1 // pred_fallthru
      _
    %v56 = vld [vmem:[#allocation2] sm:$0xff]
    %v57 = vld [vmem:[#allocation2 + $0x8] sm:$0xff]
    %v58 = vld [vmem:[#allocation5] sm:$0xff]
    %v59 = vld [vmem:[#allocation5 + $0x8] sm:$0xff]
    %v60 = vld [vmem:[#allocation5 + $0x10] sm:$0xff]
    %v61 = vld [vmem:[#allocation5 + $0x18] sm:$0xff]
    %vm62 = vcmask 261120
    %v64 = vsel %vm62, %v56, 0
    %v67 = vsel %vm62, %v57, 0
    %69 = vmatprep.subr.mxu0 0.0
    %70 = vmatpush1.msra.mxu0 %v58
    %71 = vmatprep.subr.mxu0 0.0
    %72 = vmatpush1.msra.mxu0 %v59
    %73 = vmatprep.subr.mxu0 0.0
    %74 = vmatpush1.msra.mxu0 %v60
    %75 = vmatprep.subr.mxu0 0.0
    %76 = vmatpush1.msra.mxu0 %v61
    %77 = vmatprep.subr.mxu0 0.0
    %78 = vmatpush1.msra.mxu0 0.0
    %79 = vmatprep.subr.mxu0 0.0
    %80 = vmatpush1.msra.mxu0 0.0
    %81 = vmatprep.subr.mxu0 0.0
    %82 = vmatpush1.msra.mxu0 0.0
    %83 = vmatprep.subr.mxu0 0.0
    %84 = vmatpush1.msra.mxu0 0.0
    %85 = vmatprep.subr.mxu0 0.0
    %86 = vmatpush1.msra.mxu0 0.0
    %87 = vmatprep.subr.mxu0 0.0
    %88 = vmatpush1.msra.mxu0 0.0
    %89 = vmatprep.subr.mxu0 0.0
    %90 = vmatpush1.msra.mxu0 0.0
    %91 = vmatprep.subr.mxu0 0.0
    %92 = vmatpush1.msra.mxu0 0.0
    %93 = vmatprep.subr.mxu0 0.0
    %94 = vmatpush1.msra.mxu0 0.0
    %95 = vmatprep.subr.mxu0 0.0
    %96 = vmatpush1.msra.mxu0 0.0
    %97 = vmatprep.subr.mxu0 0.0
    %98 = vmatpush1.msra.mxu0 0.0
    %99 = vmatprep.subr.mxu0 0.0
    %100 = vmatpush1.msra.mxu0 0.0
    %101 = vmatprep.subr.mxu0 0.0
    %102 = vmatpush1.msra.mxu0 0.0
    %103 = vmatprep.subr.mxu0 0.0
    %104 = vmatpush1.msra.mxu0 0.0
    %105 = vmatprep.subr.mxu0 0.0
    %106 = vmatpush1.msra.mxu0 0.0
    %107 = vmatprep.subr.mxu0 0.0
    %108 = vmatpush1.msra.mxu0 0.0
    %109 = vmatprep.subr.mxu0 0.0
    %110 = vmatpush1.msra.mxu0 0.0
    %111 = vmatprep.subr.mxu0 0.0
    %112 = vmatpush1.msra.mxu0 0.0
    %113 = vmatprep.subr.mxu0 0.0
    %114 = vmatpush1.msra.mxu0 0.0
    %115 = vmatprep.subr.mxu0 0.0
    %116 = vmatpush1.msra.mxu0 0.0
    %117 = vmatprep.subr.mxu0 0.0
    %118 = vmatpush1.msra.mxu0 0.0
    %119 = vmatprep.subr.mxu0 0.0
    %120 = vmatpush1.msra.mxu0 0.0
    %121 = vmatprep.subr.mxu0 0.0
    %122 = vmatpush1.msra.mxu0 0.0
    %123 = vmatprep.subr.mxu0 0.0
    %124 = vmatpush1.msra.mxu0 0.0
    %125 = vmatprep.subr.mxu0 0.0
    %126 = vmatpush1.msra.mxu0 0.0
    %127 = vmatprep.subr.mxu0 0.0
    %128 = vmatpush1.msra.mxu0 0.0
    %129 = vmatprep.subr.mxu0 0.0
    %130 = vmatpush1.msra.mxu0 0.0
    %131 = vmatprep.subr.mxu0 0.0
    %132 = vmatpush1.msra.mxu0 0.0
    %133 = vmatprep.mubr.f32.mxu0 0.0
    %134 = vmatmul.mubr.f32.gmra.mrb[0].mxu0 %v64
    %v135 = vpop.f32.mrb[0].mxu0
    %v136 = vadd.f32 0.0, %v135
    %v137 = vpop.f32.mrb[0].mxu0
    %138 = vmatprep.mubr.f32.mxu0 0.0
    %139 = vmatmul.mubr.f32.gmra.mrb[0].mxu0 %v67
    %v140 = vpop.f32.mrb[0].mxu0
    %v141 = vadd.f32 0.0, %v140
    %v142 = vpop.f32.mrb[0].mxu0
    %143 = vdwg.mxu0
    %vm144 = vcmask 130048
    %v145 = vsel %vm144, %v136, -inf
    %v146 = vrot.slane %v145, 4
    %v147 = vmax.f32 %v145, %v146
    %v148 = vrot.slane %v147, 2
    %v149 = vmax.f32 %v147, %v148
    %v150 = vrot.slane %v149, 1
    %v151 = vmax.f32 %v149, %v150
    %v152 = vsel %vm144, %v141, -inf
    %v153 = vrot.slane %v152, 4
    %v154 = vmax.f32 %v152, %v153
    %v155 = vrot.slane %v154, 2
    %v156 = vmax.f32 %v154, %v155
    %v157 = vrot.slane %v156, 1
    %v158 = vmax.f32 %v156, %v157
    %v159 = vsub.f32 %v136, %v151
    %v160 = vsub.f32 %v141, %v158
    %v161 = vmul.f32 %v159, 1.442695
    %v162 = vpow.pop %v161
    %v163 = vmul.f32 %v160, 1.442695
    %v164 = vpow.pop %v163
    %v165 = vsel %vm144, %v162, 0.0
    %v166 = vrot.slane %v165, 4
    %v167 = vadd.f32 %v165, %v166
    %v168 = vrot.slane %v167, 2
    %v169 = vadd.f32 %v167, %v168
    %v170 = vrot.slane %v169, 1
    %v171 = vadd.f32 %v169, %v170
    %v172 = vsel %vm144, %v164, 0.0
    %v173 = vrot.slane %v172, 4
    %v174 = vadd.f32 %v172, %v173
    %v175 = vrot.slane %v174, 2
    %v176 = vadd.f32 %v174, %v175
    %v177 = vrot.slane %v176, 1
    %v178 = vadd.f32 %v176, %v177
    %v179 = vrcp.pop %v171
    %v180 = vrcp.pop %v178
    %v181 = vmul.f32 %v162, %v179
    %v182 = vmul.f32 %v164, %v180
    %v183 = vsel %vm144, %v181, 0.0
    %184 = vadd.xlane.f32.xlu0 %v183
    %v185 = vpop.xlane.xlu0 %184
    %v186 = vsel %vm144, %v182, 0.0
    %187 = vadd.xlane.f32.xlu0 %v186
    %v188 = vpop.xlane.xlu0 %187
    %v189 = vrcp.pop %v185
    %v190 = vmul.f32 1.0, %v189
    %v191 = vrcp.pop %v188
    %v192 = vmul.f32 1.0, %v191
    %v193 = vmul.f32 %v181, %v190
    %v194 = vmul.f32 %v182, %v192
    %v195 = vld [vmem:[#allocation7] sm:$0xff]
    %v196 = vld [vmem:[#allocation7 + $0x8] sm:$0xff]
    %v198 = vsel %vm144, %v193, 0
    %v201 = vsel %vm144, %v194, 0
    %203 = vmatprep.subr.mxu0 0.0
    %204 = vmatpush1.msra.mxu0 %v195
    %205 = vmatprep.subr.mxu0 0.0
    %206 = vmatpush1.msra.mxu0 %v196
    %207 = vmatprep.subr.mxu0 0.0
    %208 = vmatpush1.msra.mxu0 0.0
    %209 = vmatprep.subr.mxu0 0.0
    %210 = vmatpush1.msra.mxu0 0.0
    %211 = vmatprep.subr.mxu0 0.0
    %212 = vmatpush1.msra.mxu0 0.0
    %213 = vmatprep.subr.mxu0 0.0
    %214 = vmatpush1.msra.mxu0 0.0
    %215 = vmatprep.subr.mxu0 0.0
    %216 = vmatpush1.msra.mxu0 0.0
    %217 = vmatprep.subr.mxu0 0.0
    %218 = vmatpush1.msra.mxu0 0.0
    %219 = vmatprep.subr.mxu0 0.0
    %220 = vmatpush1.msra.mxu0 0.0
    %221 = vmatprep.subr.mxu0 0.0
    %222 = vmatpush1.msra.mxu0 0.0
    %223 = vmatprep.subr.mxu0 0.0
    %224 = vmatpush1.msra.mxu0 0.0
    %225 = vmatprep.subr.mxu0 0.0
    %226 = vmatpush1.msra.mxu0 0.0
    %227 = vmatprep.subr.mxu0 0.0
    %228 = vmatpush1.msra.mxu0 0.0
    %229 = vmatprep.subr.mxu0 0.0
    %230 = vmatpush1.msra.mxu0 0.0
    %231 = vmatprep.subr.mxu0 0.0
    %232 = vmatpush1.msra.mxu0 0.0
    %233 = vmatprep.subr.mxu0 0.0
    %234 = vmatpush1.msra.mxu0 0.0
    %235 = vmatprep.subr.mxu0 0.0
    %236 = vmatpush1.msra.mxu0 0.0
    %237 = vmatprep.subr.mxu0 0.0
    %238 = vmatpush1.msra.mxu0 0.0
    %239 = vmatprep.subr.mxu0 0.0
    %240 = vmatpush1.msra.mxu0 0.0
    %241 = vmatprep.subr.mxu0 0.0
    %242 = vmatpush1.msra.mxu0 0.0
    %243 = vmatprep.subr.mxu0 0.0
    %244 = vmatpush1.msra.mxu0 0.0
    %245 = vmatprep.subr.mxu0 0.0
    %246 = vmatpush1.msra.mxu0 0.0
    %247 = vmatprep.subr.mxu0 0.0
    %248 = vmatpush1.msra.mxu0 0.0
    %249 = vmatprep.subr.mxu0 0.0
    %250 = vmatpush1.msra.mxu0 0.0
    %251 = vmatprep.subr.mxu0 0.0
    %252 = vmatpush1.msra.mxu0 0.0
    %253 = vmatprep.subr.mxu0 0.0
    %254 = vmatpush1.msra.mxu0 0.0
    %255 = vmatprep.subr.mxu0 0.0
    %256 = vmatpush1.msra.mxu0 0.0
    %257 = vmatprep.subr.mxu0 0.0
    %258 = vmatpush1.msra.mxu0 0.0
    %259 = vmatprep.subr.mxu0 0.0
    %260 = vmatpush1.msra.mxu0 0.0
    %261 = vmatprep.subr.mxu0 0.0
    %262 = vmatpush1.msra.mxu0 0.0
    %263 = vmatprep.subr.mxu0 0.0
    %264 = vmatpush1.msra.mxu0 0.0
    %265 = vmatprep.subr.mxu0 0.0
    %266 = vmatpush1.msra.mxu0 0.0
    %267 = vmatprep.mubr.f32.mxu0 0.0
    %268 = vmatmul.mubr.f32.gmra.mrb[0].mxu0 %v198
    %v269 = vpop.f32.mrb[0].mxu0
    %v270 = vadd.f32 0.0, %v269
    %v271 = vpop.f32.mrb[0].mxu0
    %272 = vmatprep.mubr.f32.mxu0 0.0
    %273 = vmatmul.mubr.f32.gmra.mrb[0].mxu0 %v201
    %v274 = vpop.f32.mrb[0].mxu0
    %v275 = vadd.f32 0.0, %v274
    %v276 = vpop.f32.mrb[0].mxu0
    %277 = vdwg.mxu0
    %v278 = vadd.f32 %v270, %v56
    %v279 = vadd.f32 %v275, %v57
    %280 = vst.msk [vmem:[#allocation8] sm:$0xff] %vm62, %v278
    %281 = vst.msk [vmem:[#allocation8 + $0x8] sm:$0xff] %vm62, %v279
    // Predicated region
    $region26: #{tpu_custom_call.1} parent=1 // pred_check
      _
    $region27: #{tpu_custom_call.1} parent=1 // pred_check_branch
      %283 = sbr.rel (0) target = $region29
    $region28: #{tpu_custom_call.1} parent=1 // pred_region
      %s285 = ssub.s32 256, 256
      %286 = vsyncadd [#allocation4], %s285
      %s287 = sshll.u32 [#allocation8], 4
      %s288 = int_to_ptr.vmem [resolvable:$true] %s287
      %293 = dma.vmem_to_hbm [thread:$0]  %s288, 256, %s3, [#allocation4], 128, 128, 8
    $region29: #{tpu_custom_call.1} parent=1 // pred_fallthru
      _
    // Predicated region
    $region30: #{tpu_custom_call.1} parent=1 // pred_check
      _
    $region31: #{tpu_custom_call.1} parent=1 // pred_check_branch
      %295 = sbr.rel (0) target = $region33
    $region32: #{tpu_custom_call.1} parent=1 // pred_region
      %296 = dma.done [#allocation4], 256
    $region33: #{tpu_custom_call.1} parent=1 // pred_fallthru
      _
    %297 = vsyncpa [#allocation3], 1
    %298 = vsyncpa [#allocation6], 1
    %299 = vsyncpa [#allocation4], 1

</llo_original>
